<compile_context>
chip_gen: v5e
topology: v5e:2x2
jax: 0.10.0
libtpu: 0.0.40
codegen_flags: <defaults>
</compile_context>

<pallas_src>
import jax
import jax.numpy as jnp
from jax.experimental import pallas as pl
from jax.experimental.pallas import tpu as pltpu

_LANES = 128
_SUB = 32  # tile-row granularity: covers f32(8)/bf16(16)/int8-fp8(32) packing


def _rmse_partial_kernel(yhat_ref, y_ref, out_ref):
    """Accumulate sum((yhat - y)^2) of this core's row range onto (8,128)."""
    i = pl.program_id(1)  # reduction ("arbitrary") axis

    @pl.when(i == 0)
    def _init():
        out_ref[...] = jnp.zeros_like(out_ref)

    # Upcast in-kernel: inputs stream HBM->VMEM in their native dtype (halves
    # DMA traffic for bf16); math is done in f32.
    d = yhat_ref[...].astype(jnp.float32) - y_ref[...].astype(jnp.float32)
    sq = d * d                                        # (TR, 128) on the VPU
    # Fold TR rows onto 8 sublanes with pure elementwise vreg adds (no XLU
    # reduce in the steady-state loop).
    out_ref[...] += jnp.sum(sq.reshape(-1, 8, _LANES), axis=0)


def _tpu_defaults():
    """(num_tensorcores, target bytes per input block) for the local TPU."""
    try:
        kind = jax.devices()[0].device_kind.lower()
    except Exception:
        return 1, 4 << 20
    if "v7" in kind or "7x" in kind:
        # 2 TCs/chip, ~3.2 TB/s HBM per TC: split rows across cores and use
        # bigger blocks so the ~0.35us/step fixed overhead stays small.
        return 2, 8 << 20
    if "v5 lite" in kind or "v5lite" in kind or "v5e" in kind:
        # v5e: 16 MiB default scoped VMEM -> 2 MiB blocks (x2 inputs x2 bufs).
        return 1, 2 << 20
    return 1, 4 << 20  # v4 / v5p / v6e


def _sq_diff_sum(a, b):
    d = a.astype(jnp.float32) - b.astype(jnp.float32)
    return jnp.sum(d * d)


def rmse_loss(yhat: jax.Array, y: jax.Array, eps: float = 1e-6, *,
              tile_rows: int | None = None,
              num_cores: int | None = None) -> jax.Array:
    """sqrt(mean((yhat - y)**2) + eps), matching torch RMSELoss.forward."""
    assert yhat.shape == y.shape, "yhat and y must have identical shapes"
    n = yhat.size
    assert n > 0

    def _prep(a):
        if not jnp.issubdtype(a.dtype, jnp.floating):
            a = a.astype(jnp.float32)
        return a.reshape(-1)

    fh, fy = _prep(yhat), _prep(y)

    det_cores, block_bytes = _tpu_defaults()
    cores = max(1, int(num_cores)) if num_cores is not None else det_cores

    itemsize = max(fh.dtype.itemsize, fy.dtype.itemsize)
    tr = (block_bytes // (_LANES * itemsize)) if tile_rows is None else int(tile_rows)
    tr = max(_SUB, (tr // _SUB) * _SUB)

    # Lane alignment.  n % 128 == 0 -> zero-copy reshape; otherwise pad only to
    # the next multiple of 128 (padded zeros add nothing to the squared sum;
    # the mean below uses the TRUE element count).
    # TODO(synk): fully zero-copy misaligned path = memory_space=pl.ANY inputs
    # + manual make_async_copy chunks with masking of the final partial chunk.
    rem = n % _LANES
    if rem:
        fh = jnp.pad(fh, (0, _LANES - rem))
        fy = jnp.pad(fy, (0, _LANES - rem))
    rows = fh.size // _LANES

    if cores > 1 and rows // (tr * cores) == 0:
        cores = 1  # not enough rows to feed both TensorCores
    chunk_rows = tr * cores
    steps = rows // chunk_rows          # grid steps per core
    rows_main = steps * chunk_rows      # rows streamed through the kernel

    sq_sum = jnp.float32(0.0)
    if steps > 0:
        yh2 = fh.reshape(rows, _LANES)  # free (contiguous bitcast)
        yy2 = fy.reshape(rows, _LANES)

        def in_map(c, i):
            return (c * steps + i, 0)   # contiguous row half per core

        blk_bytes = tr * _LANES * (fh.dtype.itemsize + fy.dtype.itemsize)
        partials = pl.pallas_call(
            _rmse_partial_kernel,
            out_shape=jax.ShapeDtypeStruct((cores, 8, _LANES), jnp.float32),
            grid=(cores, steps),
            in_specs=[
                pl.BlockSpec((tr, _LANES), in_map),
                pl.BlockSpec((tr, _LANES), in_map),
            ],
            # Per-core partial-sum block, resident in VMEM across the
            # reduction axis (output-as-accumulator).
            out_specs=pl.BlockSpec((None, 8, _LANES), lambda c, i: (c, 0, 0)),
            compiler_params=pltpu.CompilerParams(
                dimension_semantics=("parallel", "arbitrary"),
                vmem_limit_bytes=int(2 * blk_bytes + (4 << 20)),
            ),
            cost_estimate=pl.CostEstimate(
                flops=3 * rows_main * _LANES,
                transcendentals=0,
                bytes_accessed=rows_main * _LANES
                * (fh.dtype.itemsize + fy.dtype.itemsize)
                + cores * 8 * _LANES * 4,
            ),
        )(yh2, yy2)
        sq_sum = jnp.sum(partials)

    # Tail: rows past the tile-aligned prefix (< tr*cores rows, incl. any lane
    # padding) -> tiny fused XLA sum of squares, folded in before the sqrt.
    if rows_main * _LANES < fh.size:
        sq_sum = sq_sum + _sq_diff_sum(fh[rows_main * _LANES:],
                                       fy[rows_main * _LANES:])

    return jnp.sqrt(sq_sum / n + eps)


if __name__ == "__main__":
    key = jax.random.PRNGKey(0)
    k = jax.random.split(key, 6)
    eps = 1e-6

    # Case 1: typical regression-head output (batch, 1) f32 -> small-input
    # path (no tile-sized prefix to stream; handled by the jnp tail).
    yh1 = jax.random.normal(k[0], (16, 1), dtype=jnp.float32)
    y1 = jax.random.normal(k[1], (16, 1), dtype=jnp.float32)
    l1 = rmse_loss(yh1, y1, eps)
    jax.block_until_ready(l1)
    r1 = jnp.sqrt(jnp.mean((yh1 - y1) ** 2) + eps)
    assert jnp.allclose(l1, r1, rtol=1e-5, atol=1e-6), (l1, r1)

    # Case 2: lane-aligned f32 (64, 256) with small tiles -> zero-copy reshape,
    # multi-step streaming accumulation through the Pallas kernel, no tail.
    yh2 = jax.random.normal(k[2], (64, 256), dtype=jnp.float32)
    y2 = jax.random.normal(k[3], (64, 256), dtype=jnp.float32)
    l2 = rmse_loss(yh2, y2, eps, tile_rows=32)
    jax.block_until_ready(l2)
    r2 = jnp.sqrt(jnp.mean((yh2 - y2) ** 2) + eps)
    assert jnp.allclose(l2, r2, rtol=1e-5, atol=1e-6), (l2, r2)

    # Case 3: ragged bf16 (300, 130) -> minimal lane pad, kernel over the
    # tile-aligned prefix (multiple grid steps), jnp tail fold-in.
    yh3 = jax.random.normal(k[4], (300, 130), dtype=jnp.bfloat16)
    y3 = jax.random.normal(k[5], (300, 130), dtype=jnp.bfloat16)
    l3 = rmse_loss(yh3, y3, eps, tile_rows=64)
    jax.block_until_ready(l3)
    r3 = jnp.sqrt(
        jnp.mean((yh3.astype(jnp.float32) - y3.astype(jnp.float32)) ** 2) + eps)
    assert jnp.allclose(l3, r3, rtol=1e-4, atol=1e-5), (l3, r3)

    print("KERNEL_OK")
</pallas_src>

<mosaic_0001>
module attributes {stable_mosaic.version = 11 : i64} {
  func.func @_rmse_partial_kernel(%arg0: i32, %arg1: i32, %arg2: memref<32x128xf32, #tpu.memory_space<vmem>>, %arg3: memref<32x128xf32, #tpu.memory_space<vmem>>, %arg4: memref<1x8x128xf32, #tpu.memory_space<vmem>>) attributes {dimension_semantics = [#tpu.dimension_semantics<parallel>, #tpu.dimension_semantics<arbitrary>], iteration_bounds = array<i64: 1, 4>, scalar_prefetch = 0 : i64, scratch_operands = 0 : i64, tpu.core_type = #tpu.core_type<tc>, window_params = [{transform_indices = @transform_0, window_bounds = array<i64: 32, 128>}, {transform_indices = @transform_1, window_bounds = array<i64: 32, 128>}, {transform_indices = @transform_2, window_bounds = array<i64: 1, 8, 128>}]} {
    %c0_i32 = arith.constant 0 : i32
    %0 = arith.cmpi eq, %arg1, %c0_i32 : i32
    %1 = arith.extui %0 : i1 to i32
    %c0_i32_0 = arith.constant 0 : i32
    %2 = arith.cmpi ne, %1, %c0_i32_0 : i32
    scf.if %2 {
      %cst_10 = arith.constant 0.000000e+00 : f32
      %15 = vector.broadcast %cst_10 : f32 to vector<8x128xf32>
      %c0_11 = arith.constant 0 : index
      %c0_12 = arith.constant 0 : index
      %c0_13 = arith.constant 0 : index
      %16 = vector.load %arg4[%c0_11, %c0_12, %c0_13] : memref<1x8x128xf32, #tpu.memory_space<vmem>>, vector<1x8x128xf32>
      %17 = vector.shape_cast %16 : vector<1x8x128xf32> to vector<8x128xf32>
      %18 = vector.shape_cast %15 : vector<8x128xf32> to vector<1x8x128xf32>
      tpu.vector_store %arg4[%c0_11, %c0_12, %c0_13], %18 {strides = array<i32>} : memref<1x8x128xf32, #tpu.memory_space<vmem>>, vector<1x8x128xf32>,
    } else {
    }
    %c0 = arith.constant 0 : index
    %c0_1 = arith.constant 0 : index
    %3 = vector.load %arg2[%c0, %c0_1] : memref<32x128xf32, #tpu.memory_space<vmem>>, vector<32x128xf32>
    %c0_2 = arith.constant 0 : index
    %c0_3 = arith.constant 0 : index
    %4 = vector.load %arg3[%c0_2, %c0_3] : memref<32x128xf32, #tpu.memory_space<vmem>>, vector<32x128xf32>
    %5 = arith.subf %3, %4 : vector<32x128xf32>
    %6 = arith.mulf %5, %5 : vector<32x128xf32>
    %c0_4 = arith.constant 0 : index
    %c0_5 = arith.constant 0 : index
    %c0_6 = arith.constant 0 : index
    %7 = vector.load %arg4[%c0_4, %c0_5, %c0_6] : memref<1x8x128xf32, #tpu.memory_space<vmem>>, vector<1x8x128xf32>
    %8 = vector.shape_cast %7 : vector<1x8x128xf32> to vector<8x128xf32>
    %9 = vector.shape_cast %6 : vector<32x128xf32> to vector<4x8x128xf32>
    %cst = arith.constant dense<0.000000e+00> : vector<8x128xf32>
    %10 = vector.multi_reduction <add>, %9, %cst [0] : vector<4x8x128xf32> to vector<8x128xf32>
    %11 = arith.addf %8, %10 : vector<8x128xf32>
    %c0_7 = arith.constant 0 : index
    %c0_8 = arith.constant 0 : index
    %c0_9 = arith.constant 0 : index
    %12 = vector.load %arg4[%c0_7, %c0_8, %c0_9] : memref<1x8x128xf32, #tpu.memory_space<vmem>>, vector<1x8x128xf32>
    %13 = vector.shape_cast %12 : vector<1x8x128xf32> to vector<8x128xf32>
    %14 = vector.shape_cast %11 : vector<8x128xf32> to vector<1x8x128xf32>
    tpu.vector_store %arg4[%c0_7, %c0_8, %c0_9], %14 {strides = array<i32>} : memref<1x8x128xf32, #tpu.memory_space<vmem>>, vector<1x8x128xf32>,
    return
  }
  func.func @transform_0(%arg0: i32, %arg1: i32) -> (i32, i32) {
    %c4_i32 = arith.constant 4 : i32
    %0 = arith.muli %arg0, %c4_i32 : i32
    %1 = arith.addi %0, %arg1 : i32
    %c0_i32 = arith.constant 0 : i32
    %c0_i32_0 = arith.constant 0 : i32
    return %1, %c0_i32 : i32, i32
  }
  func.func @transform_1(%arg0: i32, %arg1: i32) -> (i32, i32) {
    %c4_i32 = arith.constant 4 : i32
    %0 = arith.muli %arg0, %c4_i32 : i32
    %1 = arith.addi %0, %arg1 : i32
    %c0_i32 = arith.constant 0 : i32
    %c0_i32_0 = arith.constant 0 : i32
    return %1, %c0_i32 : i32, i32
  }
  func.func @transform_2(%arg0: i32, %arg1: i32) -> (i32, i32, i32) {
    %c0_i32 = arith.constant 0 : i32
    %c0_i32_0 = arith.constant 0 : i32
    %c0_i32_1 = arith.constant 0 : i32
    return %arg0, %c0_i32, %c0_i32_0 : i32, i32, i32
  }
}

</mosaic_0001>

<llo_original>
// kernel: tpu_custom_call.1
$region0: #{tpu_custom_call.1}
  #allocation0 [shape = 'u32[]', space=smem, size = 0x4, offset = 0x4, fixed_abs, tag = 'smem constant byte address 0x4 - core index']
  #allocation1 [shape = 'u32[72,128]{1,0:T(1,128)}', space=vmem, size = 0x9000, scoped, tag = 'internal scratch']
  %s0 = inlined_call_operand.hbm [shape: f32[128,128], index: 0, kind: input, shape index: {}]
  %s1 = inlined_call_operand.hbm [shape: f32[128,128], index: 1, kind: input, shape index: {}]
  %s2 = inlined_call_operand.hbm [shape: f32[1,8,128], index: 2, kind: output, shape index: {}]
  %s3 = sld [smem:[#allocation0]]
  $region53: #{tpu_custom_call.1} parent=0
    _
  %s5 = ssub.s32 1, %s3
  %s6 = scalar_select 0, %s5, %s3
  $region1: #{tpu_custom_call.1} parent=0
    #allocation2 [shape = 'u8[32768]{0}', space=vmem, size = 0x8000, scoped, tag = 'input window, operand 0']
    #allocation3 [shape = 's32[2]{0}', space=sflag, size = 0x8, scoped, tag = 'scoped memory for tpu_custom_call.1']
    #allocation4 [shape = 's32[2]{0}', space=sflag, size = 0x8, scoped, tag = 'scoped memory for tpu_custom_call.1']
    #allocation5 [shape = 'u8[32768]{0}', space=vmem, size = 0x8000, scoped, tag = 'input window, operand 1']
    #allocation6 [shape = 's32[2]{0}', space=sflag, size = 0x8, scoped, tag = 'scoped memory for tpu_custom_call.1']
    #allocation7 [shape = 'u8[4096]{0}', space=vmem, size = 0x1000, scoped, tag = 'output window, operand 0, single buffered']
    %7 = vsyncpa [#allocation3], 0
    %s8 = scalar_lea.sflag [#allocation3], 1
    %9 = vsyncpa %s8, 0
    %10 = vsyncpa [#allocation6], 0
    %s11 = scalar_lea.sflag [#allocation6], 1
    %12 = vsyncpa %s11, 0
    %13 = vsyncpa [#allocation4], 0
    loop: start=0, step=1, limit=6
    $region2: #{tpu_custom_call.1} parent=1 // loop_pre_header
      _
    $region3: #{tpu_custom_call.1} parent=1 // loop_header
      %s15 = sphi 0, %s19
      %p16 = scmp.ge.s32.totalorder %s15, 6
      %s22 = sphi 0, %s34
      %s23 = sphi 0, %s30
      %s24 = sphi 0, %s22
      %s25 = sphi 0, %s23
      %s26 = sphi 0, %s24
      %s27 = sphi 0, %s25
      %s41 = sphi 0, %s43
      %s44 = sphi 0, %s41
      %s45 = sphi 0, %s44
      %s61 = sphi 0, %s45
      %s71 = sphi 0, %s73
      %s74 = sphi 0, %s71
      %s75 = sphi 0, %s74
      %s91 = sphi 0, %s75
      %s97 = sphi 0, %s99
      %s100 = sphi 0, %s97
      %s101 = sphi 0, %s100
      %s117 = sphi 0, %s101
    $region4: #{tpu_custom_call.1} parent=1 // loop_header_branch
      %18 = sbr.rel (%p16) target = $region8
    $region5: #{tpu_custom_call.1} parent=1 // loop_body
      %s20 = ssub.s32 %s15, 1
      %s21 = ssub.s32 %s15, 2
      %s28 = sadd.s32 1, %s23
      %p29 = scmp.ge.s32.totalorder %s28, 4
      %s30 = scalar_select %p29, 0, %s28
      %s31 = sadd.s32 1, %s22
      %s32 = scalar_select %p29, %s31, %s22
      %p33 = scmp.ge.s32.totalorder %s32, 1
      %s34 = scalar_select %p33, 0, %s32
      %s35 = smul.u32 %s22, 4
      %s36 = sadd.s32 %s35, %s23
      %s37 = smul.u32 %s34, 4
      %s38 = sadd.s32 %s37, %s30
      %s39 = ssub.s32 %s36, %s38
      %p40 = scmp.eq.s32.totalorder %s39, 0
      %s42 = sadd.s32 %s41, 1
      %s43 = scalar_select %p40, %s41, %s42
      %p46 = pneg %p40
      %p47 = scmp.eq.s32.totalorder %s15, 3
      %p48 = por %p46, %p47
      %p49 = scmp.ne.s32.totalorder %s41, %s44
      %p50 = scmp.eq.s32.totalorder %s15, 0
      %p51 = por %p49, %p50
      %p52 = scmp.ne.s32.totalorder %s41, %s44
      %p53 = scmp.eq.s32.totalorder %s20, 3
      %p54 = por %p52, %p53
      %p55 = scmp.ne.s32.totalorder %s44, %s45
      %p56 = scmp.eq.s32.totalorder %s20, 0
      %p57 = por %p55, %p56
      %p58 = scmp.ne.s32.totalorder %s44, %s45
      %p59 = scmp.eq.s32.totalorder %s21, 3
      %p60 = por %p58, %p59
      %p62 = scmp.ne.s32.totalorder %s45, %s61
      %p63 = scmp.eq.s32.totalorder %s21, 0
      %p64 = por %p62, %p63
      %s65 = smul.u32 %s22, 4
      %s66 = sadd.s32 %s65, %s23
      %s67 = smul.u32 %s34, 4
      %s68 = sadd.s32 %s67, %s30
      %s69 = ssub.s32 %s66, %s68
      %p70 = scmp.eq.s32.totalorder %s69, 0
      %s72 = sadd.s32 %s71, 1
      %s73 = scalar_select %p70, %s71, %s72
      %p76 = pneg %p70
      %p77 = scmp.eq.s32.totalorder %s15, 3
      %p78 = por %p76, %p77
      %p79 = scmp.ne.s32.totalorder %s71, %s74
      %p80 = scmp.eq.s32.totalorder %s15, 0
      %p81 = por %p79, %p80
      %p82 = scmp.ne.s32.totalorder %s71, %s74
      %p83 = scmp.eq.s32.totalorder %s20, 3
      %p84 = por %p82, %p83
      %p85 = scmp.ne.s32.totalorder %s74, %s75
      %p86 = scmp.eq.s32.totalorder %s20, 0
      %p87 = por %p85, %p86
      %p88 = scmp.ne.s32.totalorder %s74, %s75
      %p89 = scmp.eq.s32.totalorder %s21, 3
      %p90 = por %p88, %p89
      %p92 = scmp.ne.s32.totalorder %s75, %s91
      %p93 = scmp.eq.s32.totalorder %s21, 0
      %p94 = por %p92, %p93
      %s95 = ssub.s32 %s22, %s34
      %p96 = scmp.eq.s32.totalorder %s95, 0
      %s98 = sadd.s32 %s97, 1
      %s99 = scalar_select %p96, %s97, %s98
      %p102 = pneg %p96
      %p103 = scmp.eq.s32.totalorder %s15, 3
      %p104 = por %p102, %p103
      %p105 = scmp.ne.s32.totalorder %s97, %s100
      %p106 = scmp.eq.s32.totalorder %s15, 0
      %p107 = por %p105, %p106
      %p108 = scmp.ne.s32.totalorder %s97, %s100
      %p109 = scmp.eq.s32.totalorder %s20, 3
      %p110 = por %p108, %p109
      %p111 = scmp.ne.s32.totalorder %s100, %s101
      %p112 = scmp.eq.s32.totalorder %s20, 0
      %p113 = por %p111, %p112
      %p114 = scmp.ne.s32.totalorder %s100, %s101
      %p115 = scmp.eq.s32.totalorder %s21, 3
      %p116 = por %p114, %p115
      %p118 = scmp.ne.s32.totalorder %s101, %s117
      %p119 = scmp.eq.s32.totalorder %s21, 0
      %p120 = por %p118, %p119
      %p121 = scmp.le.s32.totalorder 1, %s15
      %p122 = scmp.lt.s32.totalorder %s15, 5
      %p123 = pnand %p121, %p122
      %p124 = pneg %p123
      // Predicated region
      $region9: #{tpu_custom_call.1} parent=5 // pred_check
        _
      $region10: #{tpu_custom_call.1} parent=5 // pred_check_branch
        %126 = sbr.rel (%p123) target = $region12
      $region11: #{tpu_custom_call.1} parent=5 // pred_region
        %s127 = ssub.s32 %s15, 1
      $region12: #{tpu_custom_call.1} parent=5 // pred_fallthru
        _
      %p128 = scmp.lt.s32.totalorder %s15, 4
      // Predicated region
      $region13: #{tpu_custom_call.1} parent=5 // pred_check
        %p129 = pneg %p128
      $region14: #{tpu_custom_call.1} parent=5 // pred_check_branch
        %131 = sbr.rel (%p129) target = $region16
      $region15: #{tpu_custom_call.1} parent=5 // pred_region
        // Predicated region
        $region17: #{tpu_custom_call.1} parent=15 // pred_check
          %p132 = pneg %p51
        $region18: #{tpu_custom_call.1} parent=15 // pred_check_branch
          %134 = sbr.rel (%p132) target = $region20
        $region19: #{tpu_custom_call.1} parent=15 // pred_region
          %s135 = sand.u32 %s41, 1
          %s136 = scalar_lea.sflag [#allocation3], %s135
          %s137 = sand.u32 %s41, 1
          %s138 = smul.addr %s137, 32
          %s139 = scalar_lea.vmem [#allocation2], %s138
          %s140 = smul.u32 %s22, 4
          %s141 = sadd.s32 %s140, %s23
          %s142 = smul.u32 4, %s141
          %144 = vsyncadd %s136, 0
          %s145 = smul.addr %s142, 8
          %s146 = scalar_lea.hbm %s0, %s145
          %s147 = sshll.u32 %s146, 4
          %s148 = int_to_ptr.hbm [resolvable:$true] %s147
          %s149 = sshll.u32 %s139, 4
          %s150 = int_to_ptr.vmem [resolvable:$true] %s149
          %155 = dma.hbm_to_vmem [thread:$0]  %s148, 512, %s150, %s136, 128, 128, 8
        $region20: #{tpu_custom_call.1} parent=15 // pred_fallthru
          _
        // Predicated region
        $region21: #{tpu_custom_call.1} parent=15 // pred_check
          %p156 = pneg %p81
        $region22: #{tpu_custom_call.1} parent=15 // pred_check_branch
          %158 = sbr.rel (%p156) target = $region24
        $region23: #{tpu_custom_call.1} parent=15 // pred_region
          %s159 = sand.u32 %s71, 1
          %s160 = scalar_lea.sflag [#allocation6], %s159
          %s161 = sand.u32 %s71, 1
          %s162 = smul.addr %s161, 32
          %s163 = scalar_lea.vmem [#allocation5], %s162
          %s164 = smul.u32 %s22, 4
          %s165 = sadd.s32 %s164, %s23
          %s166 = smul.u32 4, %s165
          %168 = vsyncadd %s160, 0
          %s169 = smul.addr %s166, 8
          %s170 = scalar_lea.hbm %s1, %s169
          %s171 = sshll.u32 %s170, 4
          %s172 = int_to_ptr.hbm [resolvable:$true] %s171
          %s173 = sshll.u32 %s163, 4
          %s174 = int_to_ptr.vmem [resolvable:$true] %s173
          %179 = dma.hbm_to_vmem [thread:$0]  %s172, 512, %s174, %s160, 128, 128, 8
        $region24: #{tpu_custom_call.1} parent=15 // pred_fallthru
          _
      $region16: #{tpu_custom_call.1} parent=5 // pred_fallthru
        _
      %p180 = scmp.le.s32.totalorder 1, %s15
      %p181 = scmp.lt.s32.totalorder %s15, 5
      %p182 = pnand %p180, %p181
      %p183 = pneg %p182
      // Predicated region
      $region25: #{tpu_custom_call.1} parent=5 // pred_check
        _
      $region26: #{tpu_custom_call.1} parent=5 // pred_check_branch
        %185 = sbr.rel (%p182) target = $region28
      $region27: #{tpu_custom_call.1} parent=5 // pred_region
        %s186 = ssub.s32 %s15, 1
        %s187 = sand.u32 %s44, 1
        %s188 = scalar_lea.sflag [#allocation3], %s187
        %s189 = sand.u32 %s44, 1
        %s190 = smul.addr %s189, 32
        %s191 = scalar_lea.vmem [#allocation2], %s190
        // Predicated region
        $region29: #{tpu_custom_call.1} parent=27 // pred_check
          %p192 = pneg %p57
        $region30: #{tpu_custom_call.1} parent=27 // pred_check_branch
          %194 = sbr.rel (%p192) target = $region32
        $region31: #{tpu_custom_call.1} parent=27 // pred_region
          %196 = dma.done %s188, 512
        $region32: #{tpu_custom_call.1} parent=27 // pred_fallthru
          _
        %s197 = sand.u32 %s74, 1
        %s198 = scalar_lea.sflag [#allocation6], %s197
        %s199 = sand.u32 %s74, 1
        %s200 = smul.addr %s199, 32
        %s201 = scalar_lea.vmem [#allocation5], %s200
        // Predicated region
        $region33: #{tpu_custom_call.1} parent=27 // pred_check
          %p202 = pneg %p87
        $region34: #{tpu_custom_call.1} parent=27 // pred_check_branch
          %204 = sbr.rel (%p202) target = $region36
        $region35: #{tpu_custom_call.1} parent=27 // pred_region
          %206 = dma.done %s198, 512
        $region36: #{tpu_custom_call.1} parent=27 // pred_fallthru
          _
        %s207 = sand.u32 %s44, 1
        %s208 = scalar_lea.sflag [#allocation3], %s207
        %s209 = sand.u32 %s44, 1
        %s210 = smul.addr %s209, 32
        %s211 = scalar_lea.vmem [#allocation2], %s210
        %p212 = pneg %p57
        %p213 = pneg %p54
        %s214 = sand.u32 %s74, 1
        %s215 = scalar_lea.sflag [#allocation6], %s214
        %s216 = sand.u32 %s74, 1
        %s217 = smul.addr %s216, 32
        %s218 = scalar_lea.vmem [#allocation5], %s217
        %p219 = pneg %p87
        %p220 = pneg %p84
        %p221 = pneg %p113
        %p222 = pneg %p110
        %s223 = smul.u32 %s24, 4
        %s224 = sadd.s32 %s223, %s25
        %s225 = smul.u32 4, %s224
        %s226 = smul.u32 %s24, 4
        %s227 = sadd.s32 %s226, %s25
        %s228 = smul.u32 4, %s227
        %p229 = scmp.eq.s32.totalorder %s25, 0
        // Predicated region
        $region37: #{tpu_custom_call.1} parent=27 // pred_check
          %p230 = pneg %p229
        $region38: #{tpu_custom_call.1} parent=27 // pred_check_branch
          %232 = sbr.rel (%p230) target = $region40
        $region39: #{tpu_custom_call.1} parent=27 // pred_region
          %233 = vst [vmem:[#allocation7] sm:$0xff] 0.0
        $region40: #{tpu_custom_call.1} parent=27 // pred_fallthru
          _
        %v234 = vld [vmem:[%s191] sm:$0xff]
        %v235 = vld [vmem:[%s191 + $0x8] sm:$0xff]
        %v236 = vld [vmem:[%s191 + $0x10] sm:$0xff]
        %v237 = vld [vmem:[%s191 + $0x18] sm:$0xff]
        %v238 = vld [vmem:[%s201] sm:$0xff]
        %v239 = vld [vmem:[%s201 + $0x8] sm:$0xff]
        %v240 = vld [vmem:[%s201 + $0x10] sm:$0xff]
        %v241 = vld [vmem:[%s201 + $0x18] sm:$0xff]
        %v242 = vsub.f32 %v234, %v238
        %v243 = vsub.f32 %v235, %v239
        %v244 = vsub.f32 %v236, %v240
        %v245 = vsub.f32 %v237, %v241
        %v246 = vmul.f32 %v242, %v242
        %v247 = vmul.f32 %v243, %v243
        %v248 = vmul.f32 %v244, %v244
        %v249 = vmul.f32 %v245, %v245
        %v250 = vld [vmem:[#allocation7] sm:$0xff]
        %v251 = vadd.f32 %v246, %v247
        %v252 = vadd.f32 %v251, %v248
        %v253 = vadd.f32 %v252, %v249
        %v254 = vadd.f32 %v250, %v253
        %255 = vst [vmem:[#allocation7] sm:$0xff] %v254
        // Predicated region
        $region41: #{tpu_custom_call.1} parent=27 // pred_check
          %p256 = pneg %p110
        $region42: #{tpu_custom_call.1} parent=27 // pred_check_branch
          %258 = sbr.rel (%p256) target = $region44
        $region43: #{tpu_custom_call.1} parent=27 // pred_region
          %260 = vsyncadd [#allocation4], 0
          %s261 = smul.addr %s24, 8
          %s262 = scalar_lea.hbm %s2, %s261
          %s264 = sshll.u32 [#allocation7], 4
          %s265 = int_to_ptr.vmem [resolvable:$true] %s264
          %s266 = sshll.u32 %s262, 4
          %s267 = int_to_ptr.hbm [resolvable:$true] %s266
          %269 = dma.vmem_to_hbm [thread:$0]  %s265, 128, %s267, [#allocation4]
        $region44: #{tpu_custom_call.1} parent=27 // pred_fallthru
          _
        // Predicated region
        $region45: #{tpu_custom_call.1} parent=27 // pred_check
          %p270 = pneg %p110
        $region46: #{tpu_custom_call.1} parent=27 // pred_check_branch
          %272 = sbr.rel (%p270) target = $region48
        $region47: #{tpu_custom_call.1} parent=27 // pred_region
          %274 = dma.done [#allocation4], 128
        $region48: #{tpu_custom_call.1} parent=27 // pred_fallthru
          _
      $region28: #{tpu_custom_call.1} parent=5 // pred_fallthru
        _
      %p275 = scmp.le.s32.totalorder 2, %s15
      // Predicated region
      $region49: #{tpu_custom_call.1} parent=5 // pred_check
        %p276 = pneg %p275
      $region50: #{tpu_custom_call.1} parent=5 // pred_check_branch
        %278 = sbr.rel (%p276) target = $region52
      $region51: #{tpu_custom_call.1} parent=5 // pred_region
        %s279 = ssub.s32 %s15, 2
      $region52: #{tpu_custom_call.1} parent=5 // pred_fallthru
        _
    $region6: #{tpu_custom_call.1} parent=1 // loop_footer
      %s19 = sadd.s32 1, %s15
    $region7: #{tpu_custom_call.1} parent=1 // loop_footer_branch
      %14 = sbr.rel target = $region3
    $region8: #{tpu_custom_call.1} parent=1 // loop_exit
      _
    %280 = vsyncpa [#allocation3], 1
    %s281 = scalar_lea.sflag [#allocation3], 1
    %282 = vsyncpa %s281, 1
    %283 = vsyncpa [#allocation6], 1
    %s284 = scalar_lea.sflag [#allocation6], 1
    %285 = vsyncpa %s284, 1
    %286 = vsyncpa [#allocation4], 1
    %s287 = scalar_lea.sflag [#allocation4], 1
    %288 = vsyncpa %s287, 1

</llo_original>
